<compile_context>
chip_gen: v5e
topology: v5e:2x2
jax: 0.10.0
libtpu: 0.0.40
codegen_flags: <defaults>
</compile_context>

<pallas_src>
import functools

import jax
import jax.numpy as jnp
from jax.experimental import pallas as pl
from jax.experimental.pallas import tpu as pltpu


def _mlp_kernel(seed_ref, xt_ref, w1_ref, b1_ref, w2_ref, b2_ref, w3_ref, b3_ref,
                out_ref, *, dropout_p, training):
    xt = xt_ref[...]                                                 # (IN, TILE_B) bf16

    # fc1 + ReLU : (H1, IN) @ (IN, TILE_B) -> (H1, TILE_B), f32 accumulation.
    h = jnp.dot(w1_ref[...], xt, preferred_element_type=jnp.float32) + b1_ref[...]
    h = jnp.maximum(h, 0.0)

    if training and dropout_p > 0.0:
        keep_p = 1.0 - dropout_p
        # keep iff bits <= thresh (keep prob = (thresh + 1) / 2^32; off by 2^-32, negligible)
        thresh = jnp.uint32(int(keep_p * (2 ** 32 - 1)))
        inv_keep = jnp.float32(1.0 / keep_p)
        # Per-tile seed so different batch tiles draw independent dropout masks.
        pltpu.prng_seed(seed_ref[0] + pl.program_id(0))
        bits1 = pltpu.bitcast(pltpu.prng_random_bits(h.shape), jnp.uint32)
        h = jnp.where(bits1 <= thresh, h * inv_keep, 0.0)

    # fc2 + ReLU : (H2, H1) @ (H1, TILE_B) -> (H2, TILE_B).
    h2 = jnp.dot(w2_ref[...], h.astype(w2_ref.dtype),
                 preferred_element_type=jnp.float32) + b2_ref[...]
    h2 = jnp.maximum(h2, 0.0)

    if training and dropout_p > 0.0:
        bits2 = pltpu.bitcast(pltpu.prng_random_bits(h2.shape), jnp.uint32)
        h2 = jnp.where(bits2 <= thresh, h2 * inv_keep, 0.0)

    # fc3 : (1, H2) @ (H2, TILE_B) -> (1, TILE_B)  (single MXU push, lane-dense output).
    out = jnp.dot(w3_ref[...], h2.astype(w3_ref.dtype),
                  preferred_element_type=jnp.float32) + b3_ref[...]
    out_ref[...] = out.astype(out_ref.dtype)


def house_price_nn(x, params, *, dropout_p=0.5, training=False, seed=0, tile_b=512):
    """Pallas forward pass.  x: (B, input_size) float32 -> (B, 1) float32."""
    w1, b1, w2, b2, w3, b3 = params            # w: (in, out) f32, b: (1, out) f32
    B, in_size = x.shape
    h1 = w1.shape[1]
    h2 = w2.shape[1]

    # ---- layout plumbing (wrapper-side, not in-kernel) ----------------------
    bf16 = jnp.bfloat16
    n_tiles = pl.cdiv(B, tile_b)
    b_pad = n_tiles * tile_b
    xt = jnp.pad(x.T, ((0, 0), (0, b_pad - B))).astype(bf16)        # (IN, B_pad)
    w1t = w1.T.astype(bf16)                                         # (H1, IN)
    w2t = w2.T.astype(bf16)                                         # (H2, H1)
    w3t = w3.T.astype(bf16)                                         # (1,  H2)
    b1t = b1.reshape(h1, 1).astype(jnp.float32)                     # (H1, 1)
    b2t = b2.reshape(h2, 1).astype(jnp.float32)                     # (H2, 1)
    b3t = b3.reshape(1, 1).astype(jnp.float32)                      # (1, 1)
    seed_arr = jnp.asarray([seed], dtype=jnp.int32)

    kernel = functools.partial(_mlp_kernel, dropout_p=dropout_p, training=training)
    const = lambda i: (0, 0)     # weights / biases: same block every step -> stay resident

    out_t = pl.pallas_call(
        kernel,
        out_shape=jax.ShapeDtypeStruct((1, b_pad), jnp.float32),
        grid=(n_tiles,),
        in_specs=[
            pl.BlockSpec(memory_space=pltpu.MemorySpace.SMEM),       # seed scalar
            pl.BlockSpec((in_size, tile_b), lambda i: (0, i)),       # x^T batch tile
            pl.BlockSpec((h1, in_size), const),                      # w1^T
            pl.BlockSpec((h1, 1), const),                            # b1
            pl.BlockSpec((h2, h1), const),                           # w2^T
            pl.BlockSpec((h2, 1), const),                            # b2
            pl.BlockSpec((1, h2), const),                            # w3^T
            pl.BlockSpec((1, 1), const),                             # b3
        ],
        out_specs=pl.BlockSpec((1, tile_b), lambda i: (0, i)),       # lane-dense slab
        compiler_params=pltpu.CompilerParams(
            dimension_semantics=("parallel",)),                      # v7x: 2 TCs
    )(seed_arr, xt, w1t, b1t, w2t, b2t, w3t, b3t)

    return out_t[:, :B].T                                            # back to (B, 1)


def init_params(key, input_size, hidden1_size=64, hidden2_size=32):
    """Deterministic init mimicking nn.Linear default: U(-1/sqrt(fan_in), 1/sqrt(fan_in))."""
    def linear(k, fan_in, fan_out):
        kw, kb = jax.random.split(k)
        bound = 1.0 / jnp.sqrt(fan_in)
        w = jax.random.uniform(kw, (fan_in, fan_out), jnp.float32, -bound, bound)
        b = jax.random.uniform(kb, (1, fan_out), jnp.float32, -bound, bound)
        return w, b

    k1, k2, k3 = jax.random.split(key, 3)
    w1, b1 = linear(k1, input_size, hidden1_size)
    w2, b2 = linear(k2, hidden1_size, hidden2_size)
    w3, b3 = linear(k3, hidden2_size, 1)
    return (w1, b1, w2, b2, w3, b3)


def _reference_eval(x, params):
    """Pure-JAX reference mimicking the kernel math (bf16 MXU inputs, f32 accumulate);
    dropout = identity in eval mode."""
    w1, b1, w2, b2, w3, b3 = params
    bf16 = jnp.bfloat16
    h = jnp.dot(x.astype(bf16), w1.astype(bf16), preferred_element_type=jnp.float32) + b1
    h = jnp.maximum(h, 0.0)
    h = jnp.dot(h.astype(bf16), w2.astype(bf16), preferred_element_type=jnp.float32) + b2
    h = jnp.maximum(h, 0.0)
    return jnp.dot(h.astype(bf16), w3.astype(bf16), preferred_element_type=jnp.float32) + b3


if __name__ == "__main__":
    # housepricedata.csv has 10 feature columns (after dropping AboveMedianPrice).
    INPUT_SIZE = 10
    BATCH = 8

    key = jax.random.PRNGKey(0)
    k_x, k_p = jax.random.split(key)

    x = jax.random.normal(k_x, (BATCH, INPUT_SIZE), dtype=jnp.float32)
    params = init_params(k_p, INPUT_SIZE)

    # Eval-mode forward (dropout is identity), matching module.eval().
    out = jax.block_until_ready(house_price_nn(x, params, dropout_p=0.5, training=False))
    assert out.shape == (BATCH, 1)

    ref = _reference_eval(x, params)
    assert jnp.allclose(out, ref, atol=1e-2, rtol=1e-2)

    # TODO(synk): training-mode dropout (pltpu.prng_seed / prng_random_bits) needs the real
    # TPU hardware PRNG (no CPU-interpret lowering), so it is implemented but not run here.

    print("KERNEL_OK")
</pallas_src>

<mosaic_0001>
module attributes {stable_mosaic.version = 11 : i64} {
  func.func @_mlp_kernel(%arg0: i32, %arg1: memref<1xi32, #tpu.memory_space<smem>>, %arg2: memref<10x512xbf16, #tpu.memory_space<vmem>>, %arg3: memref<64x10xbf16, #tpu.memory_space<vmem>>, %arg4: memref<64x1xf32, #tpu.memory_space<vmem>>, %arg5: memref<32x64xbf16, #tpu.memory_space<vmem>>, %arg6: memref<32x1xf32, #tpu.memory_space<vmem>>, %arg7: memref<1x32xbf16, #tpu.memory_space<vmem>>, %arg8: memref<1x1xf32, #tpu.memory_space<vmem>>, %arg9: memref<1x512xf32, #tpu.memory_space<vmem>>) attributes {dimension_semantics = [#tpu.dimension_semantics<parallel>], iteration_bounds = array<i64: 1>, scalar_prefetch = 0 : i64, scratch_operands = 0 : i64, tpu.core_type = #tpu.core_type<tc>, window_params = [{transform_indices = @transform_0, window_bounds = array<i64: 1>}, {transform_indices = @transform_1, window_bounds = array<i64: 10, 512>}, {pipeline_mode = #tpu.pipeline_mode<synchronous>, transform_indices = @transform_2, window_bounds = array<i64: 64, 10>}, {pipeline_mode = #tpu.pipeline_mode<synchronous>, transform_indices = @transform_3, window_bounds = array<i64: 64, 1>}, {pipeline_mode = #tpu.pipeline_mode<synchronous>, transform_indices = @transform_4, window_bounds = array<i64: 32, 64>}, {pipeline_mode = #tpu.pipeline_mode<synchronous>, transform_indices = @transform_5, window_bounds = array<i64: 32, 1>}, {pipeline_mode = #tpu.pipeline_mode<synchronous>, transform_indices = @transform_6, window_bounds = array<i64: 1, 32>}, {pipeline_mode = #tpu.pipeline_mode<synchronous>, transform_indices = @transform_7, window_bounds = array<i64: 1, 1>}, {transform_indices = @transform_8, window_bounds = array<i64: 1, 512>}]} {
    %c0 = arith.constant 0 : index
    %c0_0 = arith.constant 0 : index
    %0 = vector.load %arg2[%c0, %c0_0] : memref<10x512xbf16, #tpu.memory_space<vmem>>, vector<10x512xbf16>
    %c0_1 = arith.constant 0 : index
    %c0_2 = arith.constant 0 : index
    %1 = vector.load %arg3[%c0_1, %c0_2] : memref<64x10xbf16, #tpu.memory_space<vmem>>, vector<64x10xbf16>
    %cst = arith.constant dense<0.000000e+00> : vector<64x512xf32>
    %2 = tpu.matmul %1, %0, %cst {dimension_numbers = #tpu.dot_dimension_numbers<[1], [0], [0], [1], [0, 0, 1, 1], [], []>} : vector<64x10xbf16>, vector<10x512xbf16>, vector<64x512xf32> -> vector<64x512xf32>
    %c0_3 = arith.constant 0 : index
    %c0_4 = arith.constant 0 : index
    %3 = vector.load %arg4[%c0_3, %c0_4] : memref<64x1xf32, #tpu.memory_space<vmem>>, vector<64x1xf32>
    %4 = vector.broadcast %3 : vector<64x1xf32> to vector<64x512xf32>
    %5 = arith.addf %2, %4 : vector<64x512xf32>
    %cst_5 = arith.constant 0.000000e+00 : f32
    %6 = vector.broadcast %cst_5 : f32 to vector<64x512xf32>
    %7 = arith.maximumf %5, %6 : vector<64x512xf32>
    %c0_6 = arith.constant 0 : index
    %c0_7 = arith.constant 0 : index
    %8 = vector.load %arg5[%c0_6, %c0_7] : memref<32x64xbf16, #tpu.memory_space<vmem>>, vector<32x64xbf16>
    %9 = arith.truncf %7 : vector<64x512xf32> to vector<64x512xbf16>
    %cst_8 = arith.constant dense<0.000000e+00> : vector<32x512xf32>
    %10 = tpu.matmul %8, %9, %cst_8 {dimension_numbers = #tpu.dot_dimension_numbers<[1], [0], [0], [1], [0, 0, 1, 1], [], []>} : vector<32x64xbf16>, vector<64x512xbf16>, vector<32x512xf32> -> vector<32x512xf32>
    %c0_9 = arith.constant 0 : index
    %c0_10 = arith.constant 0 : index
    %11 = vector.load %arg6[%c0_9, %c0_10] : memref<32x1xf32, #tpu.memory_space<vmem>>, vector<32x1xf32>
    %12 = vector.broadcast %11 : vector<32x1xf32> to vector<32x512xf32>
    %13 = arith.addf %10, %12 : vector<32x512xf32>
    %cst_11 = arith.constant 0.000000e+00 : f32
    %14 = vector.broadcast %cst_11 : f32 to vector<32x512xf32>
    %15 = arith.maximumf %13, %14 : vector<32x512xf32>
    %c0_12 = arith.constant 0 : index
    %c0_13 = arith.constant 0 : index
    %16 = vector.load %arg7[%c0_12, %c0_13] : memref<1x32xbf16, #tpu.memory_space<vmem>>, vector<1x32xbf16>
    %17 = arith.truncf %15 : vector<32x512xf32> to vector<32x512xbf16>
    %cst_14 = arith.constant dense<0.000000e+00> : vector<1x512xf32>
    %18 = tpu.matmul %16, %17, %cst_14 {dimension_numbers = #tpu.dot_dimension_numbers<[1], [0], [0], [1], [0, 0, 1, 1], [], []>} : vector<1x32xbf16>, vector<32x512xbf16>, vector<1x512xf32> -> vector<1x512xf32>
    %c0_15 = arith.constant 0 : index
    %c0_16 = arith.constant 0 : index
    %19 = vector.load %arg8[%c0_15, %c0_16] : memref<1x1xf32, #tpu.memory_space<vmem>>, vector<1x1xf32>
    %20 = vector.broadcast %19 : vector<1x1xf32> to vector<1x512xf32>
    %21 = arith.addf %18, %20 : vector<1x512xf32>
    %c0_17 = arith.constant 0 : index
    %c0_18 = arith.constant 0 : index
    %22 = vector.load %arg9[%c0_17, %c0_18] : memref<1x512xf32, #tpu.memory_space<vmem>>, vector<1x512xf32>
    tpu.vector_store %arg9[%c0_17, %c0_18], %21 {strides = array<i32>} : memref<1x512xf32, #tpu.memory_space<vmem>>, vector<1x512xf32>,
    return
  }
  func.func @transform_0(%arg0: i32) -> i32 {
    %c0_i32 = arith.constant 0 : i32
    %c0_i32_0 = arith.constant 0 : i32
    return %c0_i32 : i32
  }
  func.func @transform_1(%arg0: i32) -> (i32, i32) {
    %c0_i32 = arith.constant 0 : i32
    %c0_i32_0 = arith.constant 0 : i32
    return %c0_i32, %arg0 : i32, i32
  }
  func.func @transform_2(%arg0: i32) -> (i32, i32) {
    %c0_i32 = arith.constant 0 : i32
    %c0_i32_0 = arith.constant 0 : i32
    %c0_i32_1 = arith.constant 0 : i32
    return %c0_i32, %c0_i32_0 : i32, i32
  }
  func.func @transform_3(%arg0: i32) -> (i32, i32) {
    %c0_i32 = arith.constant 0 : i32
    %c0_i32_0 = arith.constant 0 : i32
    %c0_i32_1 = arith.constant 0 : i32
    return %c0_i32, %c0_i32_0 : i32, i32
  }
  func.func @transform_4(%arg0: i32) -> (i32, i32) {
    %c0_i32 = arith.constant 0 : i32
    %c0_i32_0 = arith.constant 0 : i32
    %c0_i32_1 = arith.constant 0 : i32
    return %c0_i32, %c0_i32_0 : i32, i32
  }
  func.func @transform_5(%arg0: i32) -> (i32, i32) {
    %c0_i32 = arith.constant 0 : i32
    %c0_i32_0 = arith.constant 0 : i32
    %c0_i32_1 = arith.constant 0 : i32
    return %c0_i32, %c0_i32_0 : i32, i32
  }
  func.func @transform_6(%arg0: i32) -> (i32, i32) {
    %c0_i32 = arith.constant 0 : i32
    %c0_i32_0 = arith.constant 0 : i32
    %c0_i32_1 = arith.constant 0 : i32
    return %c0_i32, %c0_i32_0 : i32, i32
  }
  func.func @transform_7(%arg0: i32) -> (i32, i32) {
    %c0_i32 = arith.constant 0 : i32
    %c0_i32_0 = arith.constant 0 : i32
    %c0_i32_1 = arith.constant 0 : i32
    return %c0_i32, %c0_i32_0 : i32, i32
  }
  func.func @transform_8(%arg0: i32) -> (i32, i32) {
    %c0_i32 = arith.constant 0 : i32
    %c0_i32_0 = arith.constant 0 : i32
    return %c0_i32, %arg0 : i32, i32
  }
}

</mosaic_0001>

<llo_original>
// kernel: tpu_custom_call.1
$region0: #{tpu_custom_call.1}
  #allocation0 [shape = 'u32[]', space=smem, size = 0x4, offset = 0x4, fixed_abs, tag = 'smem constant byte address 0x4 - core index']
  #allocation1 [shape = 'u32[72,128]{1,0:T(1,128)}', space=vmem, size = 0x9000, scoped, tag = 'internal scratch']
  #allocation2 [shape = 's32[1]{0:T(128)S(6)}', space=smem, size = 0x200, scoped, tag = 'scoped memory for tpu_custom_call.1']
  #allocation3 [shape = 'f32[1,1]{1,0:T(1,128)S(1)}', space=vmem, size = 0x200, scoped, tag = 'scoped memory for tpu_custom_call.1']
  %s0 = inlined_call_operand.<no memory space> [shape: s32[1], index: 0, kind: input, shape index: {}]
  %s1 = inlined_call_operand.vmem [shape: bf16[10,512], index: 1, kind: input, shape index: {}]
  %s2 = inlined_call_operand.vmem [shape: bf16[64,10], index: 2, kind: input, shape index: {}]
  %s3 = inlined_call_operand.vmem [shape: f32[64,1], index: 3, kind: input, shape index: {}]
  %s4 = inlined_call_operand.vmem [shape: bf16[32,64], index: 4, kind: input, shape index: {}]
  %s5 = inlined_call_operand.vmem [shape: f32[32,1], index: 5, kind: input, shape index: {}]
  %s6 = inlined_call_operand.vmem [shape: bf16[1,32], index: 6, kind: input, shape index: {}]
  %s7 = inlined_call_operand.<no memory space> [shape: f32[1,1], index: 7, kind: input, shape index: {}]
  %s8 = inlined_call_operand.hbm [shape: f32[1,512], index: 8, kind: output, shape index: {}]
  %s9 = sld [smem:[#allocation0]]
  $region42: #{tpu_custom_call.1} parent=0
    _
  %s11 = ssub.s32 1, %s9
  %s12 = scalar_select 0, %s11, %s9
  %13 = sst [smem:[#allocation2]] %s0
  %v14 = vstv %s7
  %15 = vst [vmem:[#allocation3] sm:$0x1] %v14
  $region1: #{tpu_custom_call.1} parent=0
    #allocation4 [shape = 'u8[2048]{0}', space=vmem, size = 0x800, scoped, tag = 'output window, operand 0, single buffered']
    #allocation5 [shape = 's32[1]{0}', space=sflag, size = 0x4, scoped, tag = 'scoped memory for tpu_custom_call.1']
    %16 = vsyncpa [#allocation5], 0
    // Predicated region
    $region2: #{tpu_custom_call.1} parent=1 // pred_check
      _
    $region3: #{tpu_custom_call.1} parent=1 // pred_check_branch
      %18 = sbr.rel (0) target = $region5
    $region4: #{tpu_custom_call.1} parent=1 // pred_region
      _
    $region5: #{tpu_custom_call.1} parent=1 // pred_fallthru
      _
    // Predicated region
    $region6: #{tpu_custom_call.1} parent=1 // pred_check
      _
    $region7: #{tpu_custom_call.1} parent=1 // pred_check_branch
      %20 = sbr.rel (0) target = $region9
    $region8: #{tpu_custom_call.1} parent=1 // pred_region
      _
    $region9: #{tpu_custom_call.1} parent=1 // pred_fallthru
      _
    // Predicated region
    $region10: #{tpu_custom_call.1} parent=1 // pred_check
      _
    $region11: #{tpu_custom_call.1} parent=1 // pred_check_branch
      %22 = sbr.rel (0) target = $region13
    $region12: #{tpu_custom_call.1} parent=1 // pred_region
      _
    $region13: #{tpu_custom_call.1} parent=1 // pred_fallthru
      _
    // Predicated region
    $region14: #{tpu_custom_call.1} parent=1 // pred_check
      _
    $region15: #{tpu_custom_call.1} parent=1 // pred_check_branch
      %24 = sbr.rel (0) target = $region17
    $region16: #{tpu_custom_call.1} parent=1 // pred_region
      _
    $region17: #{tpu_custom_call.1} parent=1 // pred_fallthru
      _
    // Predicated region
    $region18: #{tpu_custom_call.1} parent=1 // pred_check
      _
    $region19: #{tpu_custom_call.1} parent=1 // pred_check_branch
      %26 = sbr.rel (0) target = $region21
    $region20: #{tpu_custom_call.1} parent=1 // pred_region
      _
    $region21: #{tpu_custom_call.1} parent=1 // pred_fallthru
      _
    // Predicated region
    $region22: #{tpu_custom_call.1} parent=1 // pred_check
      _
    $region23: #{tpu_custom_call.1} parent=1 // pred_check_branch
      %28 = sbr.rel (0) target = $region25
    $region24: #{tpu_custom_call.1} parent=1 // pred_region
      _
    $region25: #{tpu_custom_call.1} parent=1 // pred_fallthru
      _
    // Predicated region
    $region26: #{tpu_custom_call.1} parent=1 // pred_check
      _
    $region27: #{tpu_custom_call.1} parent=1 // pred_check_branch
      %30 = sbr.rel (0) target = $region29
    $region28: #{tpu_custom_call.1} parent=1 // pred_region
      _
    $region29: #{tpu_custom_call.1} parent=1 // pred_fallthru
      _
    // Predicated region
    $region30: #{tpu_custom_call.1} parent=1 // pred_check
      _
    $region31: #{tpu_custom_call.1} parent=1 // pred_check_branch
      %32 = sbr.rel (0) target = $region33
    $region32: #{tpu_custom_call.1} parent=1 // pred_region
      _
    $region33: #{tpu_custom_call.1} parent=1 // pred_fallthru
      _
    %v34 = vld [vmem:[%s1] sm:$0xff]
    %v35 = vld [vmem:[%s1 + $0x8] sm:$0xff]
    %v36 = vld [vmem:[%s1 + $0x10] sm:$0x11]
    %v37 = vld [vmem:[%s1 + $0x18] sm:$0x11]
    %v38 = vld [vmem:[%s2] sm:$0xf]
    %v39 = vld [vmem:[%s2 + $0x4] sm:$0xf]
    %v40 = vld [vmem:[%s2 + $0x8] sm:$0xf]
    %v41 = vld [vmem:[%s2 + $0xc] sm:$0xf]
    %v42 = vld [vmem:[%s2 + $0x10] sm:$0xf]
    %v43 = vld [vmem:[%s2 + $0x14] sm:$0xf]
    %v44 = vld [vmem:[%s2 + $0x18] sm:$0xf]
    %v45 = vld [vmem:[%s2 + $0x1c] sm:$0xf]
    %v46 = vld [vmem:[%s3] sm:$0xff]
    %v47 = vld [vmem:[%s3 + $0x8] sm:$0xff]
    %v48 = vld [vmem:[%s3 + $0x10] sm:$0xff]
    %v49 = vld [vmem:[%s3 + $0x18] sm:$0xff]
    %v50 = vld [vmem:[%s3 + $0x20] sm:$0xff]
    %v51 = vld [vmem:[%s3 + $0x28] sm:$0xff]
    %v52 = vld [vmem:[%s3 + $0x30] sm:$0xff]
    %v53 = vld [vmem:[%s3 + $0x38] sm:$0xff]
    %55 = vset.pattern.permute.xlu0 0
    %56 = vperm.xlu0 %55, %v46
    %v57 = vpop.permute.xlu0 %56
    %60 = vset.pattern.permute.xlu0 0
    %61 = vperm.xlu0 %60, %v47
    %v62 = vpop.permute.xlu0 %61
    %65 = vset.pattern.permute.xlu0 0
    %66 = vperm.xlu0 %65, %v48
    %v67 = vpop.permute.xlu0 %66
    %70 = vset.pattern.permute.xlu0 0
    %71 = vperm.xlu0 %70, %v49
    %v72 = vpop.permute.xlu0 %71
    %75 = vset.pattern.permute.xlu0 0
    %76 = vperm.xlu0 %75, %v50
    %v77 = vpop.permute.xlu0 %76
    %80 = vset.pattern.permute.xlu0 0
    %81 = vperm.xlu0 %80, %v51
    %v82 = vpop.permute.xlu0 %81
    %85 = vset.pattern.permute.xlu0 0
    %86 = vperm.xlu0 %85, %v52
    %v87 = vpop.permute.xlu0 %86
    %90 = vset.pattern.permute.xlu0 0
    %91 = vperm.xlu0 %90, %v53
    %v92 = vpop.permute.xlu0 %91
    %v102 = vunpack.c.l.b16 %v38
    %v103 = vunpack.c.l.b16 %v39
    %v104 = vunpack.c.l.b16 %v40
    %v105 = vunpack.c.l.b16 %v41
    %v106 = vunpack.c.l.b16 %v42
    %v107 = vunpack.c.l.b16 %v43
    %v108 = vunpack.c.l.b16 %v44
    %v109 = vunpack.c.l.b16 %v45
    %v110 = vpack.c.b16 %v103, %v102
    %v111 = vpack.c.b16 %v105, %v104
    %v112 = vpack.c.b16 %v107, %v106
    %v113 = vpack.c.b16 %v109, %v108
    %v118 = vunpack.c.l.b16 %v34
    %v119 = vunpack.c.h.b16 %v34
    %v120 = vunpack.c.l.b16 %v35
    %v121 = vunpack.c.h.b16 %v35
    %v122 = vunpack.c.l.b16 %v36
    %v123 = vunpack.c.h.b16 %v36
    %v124 = vunpack.c.l.b16 %v37
    %v125 = vunpack.c.h.b16 %v37
    %v126 = vpack.c.b16 %v122, %v118
    %v127 = vpack.c.b16 %v123, %v119
    %v128 = vpack.c.b16 %v124, %v120
    %v129 = vpack.c.b16 %v125, %v121
    %vm130 = vcmask 80896
    %v132 = vsel %vm130, %v110, 0
    %v135 = vsel %vm130, %v111, 0
    %v138 = vsel %vm130, %v112, 0
    %v141 = vsel %vm130, %v113, 0
    %vm143 = vcmask 1044480
    %v145 = vsel %vm143, %v126, 0
    %v148 = vsel %vm143, %v127, 0
    %v151 = vsel %vm143, %v128, 0
    %v154 = vsel %vm143, %v129, 0
    %156 = vmatpush.bf16.msra.mxu0 0
    %157 = vmatpush.bf16.msra.mxu0 0
    %158 = vmatpush.bf16.msra.mxu0 0
    %159 = vmatpush.bf16.msra.mxu0 0
    %160 = vmatpush.bf16.msra.mxu0 0
    %161 = vmatpush.bf16.msra.mxu0 0
    %162 = vmatpush.bf16.msra.mxu0 0
    %163 = vmatpush.bf16.msra.mxu0 %v145
    %164 = vmatmul.bf16.gmra.mxu0 %v132
    %v165 = vpop.f32.mrf.mxu0
    %v166 = vadd.f32 %v57, %v165
    %v167 = vpop.f32.mrf.mxu0
    %v168 = vadd.f32 %v62, %v167
    %169 = vmatmul.bf16.gmra.mxu0 %v135
    %v170 = vpop.f32.mrf.mxu0
    %v171 = vadd.f32 %v67, %v170
    %v172 = vpop.f32.mrf.mxu0
    %v173 = vadd.f32 %v72, %v172
    %174 = vmatmul.bf16.gmra.mxu0 %v138
    %v175 = vpop.f32.mrf.mxu0
    %v176 = vadd.f32 %v77, %v175
    %v177 = vpop.f32.mrf.mxu0
    %v178 = vadd.f32 %v82, %v177
    %179 = vmatmul.bf16.gmra.mxu0 %v141
    %v180 = vpop.f32.mrf.mxu0
    %v181 = vadd.f32 %v87, %v180
    %v182 = vpop.f32.mrf.mxu0
    %v183 = vadd.f32 %v92, %v182
    %184 = vdwg.mxu0
    %185 = vmatpush.bf16.msra.mxu0 0
    %186 = vmatpush.bf16.msra.mxu0 0
    %187 = vmatpush.bf16.msra.mxu0 0
    %188 = vmatpush.bf16.msra.mxu0 0
    %189 = vmatpush.bf16.msra.mxu0 0
    %190 = vmatpush.bf16.msra.mxu0 0
    %191 = vmatpush.bf16.msra.mxu0 0
    %192 = vmatpush.bf16.msra.mxu0 %v148
    %193 = vmatmul.bf16.gmra.mxu0 %v132
    %v194 = vpop.f32.mrf.mxu0
    %v195 = vadd.f32 %v57, %v194
    %v196 = vpop.f32.mrf.mxu0
    %v197 = vadd.f32 %v62, %v196
    %198 = vmatmul.bf16.gmra.mxu0 %v135
    %v199 = vpop.f32.mrf.mxu0
    %v200 = vadd.f32 %v67, %v199
    %v201 = vpop.f32.mrf.mxu0
    %v202 = vadd.f32 %v72, %v201
    %203 = vmatmul.bf16.gmra.mxu0 %v138
    %v204 = vpop.f32.mrf.mxu0
    %v205 = vadd.f32 %v77, %v204
    %v206 = vpop.f32.mrf.mxu0
    %v207 = vadd.f32 %v82, %v206
    %208 = vmatmul.bf16.gmra.mxu0 %v141
    %v209 = vpop.f32.mrf.mxu0
    %v210 = vadd.f32 %v87, %v209
    %v211 = vpop.f32.mrf.mxu0
    %v212 = vadd.f32 %v92, %v211
    %213 = vdwg.mxu0
    %214 = vmatpush.bf16.msra.mxu0 0
    %215 = vmatpush.bf16.msra.mxu0 0
    %216 = vmatpush.bf16.msra.mxu0 0
    %217 = vmatpush.bf16.msra.mxu0 0
    %218 = vmatpush.bf16.msra.mxu0 0
    %219 = vmatpush.bf16.msra.mxu0 0
    %220 = vmatpush.bf16.msra.mxu0 0
    %221 = vmatpush.bf16.msra.mxu0 %v151
    %222 = vmatmul.bf16.gmra.mxu0 %v132
    %v223 = vpop.f32.mrf.mxu0
    %v224 = vadd.f32 %v57, %v223
    %v225 = vpop.f32.mrf.mxu0
    %v226 = vadd.f32 %v62, %v225
    %227 = vmatmul.bf16.gmra.mxu0 %v135
    %v228 = vpop.f32.mrf.mxu0
    %v229 = vadd.f32 %v67, %v228
    %v230 = vpop.f32.mrf.mxu0
    %v231 = vadd.f32 %v72, %v230
    %232 = vmatmul.bf16.gmra.mxu0 %v138
    %v233 = vpop.f32.mrf.mxu0
    %v234 = vadd.f32 %v77, %v233
    %v235 = vpop.f32.mrf.mxu0
    %v236 = vadd.f32 %v82, %v235
    %237 = vmatmul.bf16.gmra.mxu0 %v141
    %v238 = vpop.f32.mrf.mxu0
    %v239 = vadd.f32 %v87, %v238
    %v240 = vpop.f32.mrf.mxu0
    %v241 = vadd.f32 %v92, %v240
    %242 = vdwg.mxu0
    %243 = vmatpush.bf16.msra.mxu0 0
    %244 = vmatpush.bf16.msra.mxu0 0
    %245 = vmatpush.bf16.msra.mxu0 0
    %246 = vmatpush.bf16.msra.mxu0 0
    %247 = vmatpush.bf16.msra.mxu0 0
    %248 = vmatpush.bf16.msra.mxu0 0
    %249 = vmatpush.bf16.msra.mxu0 0
    %250 = vmatpush.bf16.msra.mxu0 %v154
    %251 = vmatmul.bf16.gmra.mxu0 %v132
    %v252 = vpop.f32.mrf.mxu0
    %v253 = vadd.f32 %v57, %v252
    %v254 = vpop.f32.mrf.mxu0
    %v255 = vadd.f32 %v62, %v254
    %256 = vmatmul.bf16.gmra.mxu0 %v135
    %v257 = vpop.f32.mrf.mxu0
    %v258 = vadd.f32 %v67, %v257
    %v259 = vpop.f32.mrf.mxu0
    %v260 = vadd.f32 %v72, %v259
    %261 = vmatmul.bf16.gmra.mxu0 %v138
    %v262 = vpop.f32.mrf.mxu0
    %v263 = vadd.f32 %v77, %v262
    %v264 = vpop.f32.mrf.mxu0
    %v265 = vadd.f32 %v82, %v264
    %266 = vmatmul.bf16.gmra.mxu0 %v141
    %v267 = vpop.f32.mrf.mxu0
    %v268 = vadd.f32 %v87, %v267
    %v269 = vpop.f32.mrf.mxu0
    %v270 = vadd.f32 %v92, %v269
    %271 = vdwg.mxu0
    %v272 = vmax.f32 %v166, 0.0
    %v273 = vmax.f32 %v195, 0.0
    %v274 = vmax.f32 %v224, 0.0
    %v275 = vmax.f32 %v253, 0.0
    %v276 = vmax.f32 %v168, 0.0
    %v277 = vmax.f32 %v197, 0.0
    %v278 = vmax.f32 %v226, 0.0
    %v279 = vmax.f32 %v255, 0.0
    %v280 = vmax.f32 %v171, 0.0
    %v281 = vmax.f32 %v200, 0.0
    %v282 = vmax.f32 %v229, 0.0
    %v283 = vmax.f32 %v258, 0.0
    %v284 = vmax.f32 %v173, 0.0
    %v285 = vmax.f32 %v202, 0.0
    %v286 = vmax.f32 %v231, 0.0
    %v287 = vmax.f32 %v260, 0.0
    %v288 = vmax.f32 %v176, 0.0
    %v289 = vmax.f32 %v205, 0.0
    %v290 = vmax.f32 %v234, 0.0
    %v291 = vmax.f32 %v263, 0.0
    %v292 = vmax.f32 %v178, 0.0
    %v293 = vmax.f32 %v207, 0.0
    %v294 = vmax.f32 %v236, 0.0
    %v295 = vmax.f32 %v265, 0.0
    %v296 = vmax.f32 %v181, 0.0
    %v297 = vmax.f32 %v210, 0.0
    %v298 = vmax.f32 %v239, 0.0
    %v299 = vmax.f32 %v268, 0.0
    %v300 = vmax.f32 %v183, 0.0
    %v301 = vmax.f32 %v212, 0.0
    %v302 = vmax.f32 %v241, 0.0
    %v303 = vmax.f32 %v270, 0.0
    %v304 = vld [vmem:[%s4] sm:$0xf]
    %v305 = vld [vmem:[%s4 + $0x4] sm:$0xf]
    %v306 = vld [vmem:[%s4 + $0x8] sm:$0xf]
    %v307 = vld [vmem:[%s4 + $0xc] sm:$0xf]
    %v308 = vpack.c.bf16 %v276, %v272
    %v309 = vpack.c.bf16 %v277, %v273
    %v310 = vpack.c.bf16 %v278, %v274
    %v311 = vpack.c.bf16 %v279, %v275
    %v312 = vpack.c.bf16 %v284, %v280
    %v313 = vpack.c.bf16 %v285, %v281
    %v314 = vpack.c.bf16 %v286, %v282
    %v315 = vpack.c.bf16 %v287, %v283
    %v316 = vpack.c.bf16 %v292, %v288
    %v317 = vpack.c.bf16 %v293, %v289
    %v318 = vpack.c.bf16 %v294, %v290
    %v319 = vpack.c.bf16 %v295, %v291
    %v320 = vpack.c.bf16 %v300, %v296
    %v321 = vpack.c.bf16 %v301, %v297
    %v322 = vpack.c.bf16 %v302, %v298
    %v323 = vpack.c.bf16 %v303, %v299
    %v324 = vld [vmem:[%s5] sm:$0xff]
    %v325 = vld [vmem:[%s5 + $0x8] sm:$0xff]
    %v326 = vld [vmem:[%s5 + $0x10] sm:$0xff]
    %v327 = vld [vmem:[%s5 + $0x18] sm:$0xff]
    %329 = vset.pattern.permute.xlu0 0
    %330 = vperm.xlu0 %329, %v324
    %v331 = vpop.permute.xlu0 %330
    %334 = vset.pattern.permute.xlu0 0
    %335 = vperm.xlu0 %334, %v325
    %v336 = vpop.permute.xlu0 %335
    %339 = vset.pattern.permute.xlu0 0
    %340 = vperm.xlu0 %339, %v326
    %v341 = vpop.permute.xlu0 %340
    %344 = vset.pattern.permute.xlu0 0
    %345 = vperm.xlu0 %344, %v327
    %v346 = vpop.permute.xlu0 %345
    %v352 = vunpack.c.l.b16 %v304
    %v353 = vunpack.c.l.b16 %v305
    %v354 = vunpack.c.l.b16 %v306
    %v355 = vunpack.c.l.b16 %v307
    %v356 = vpack.c.b16 %v353, %v352
    %v357 = vpack.c.b16 %v355, %v354
    %vm358 = vcmask 523264
    %v360 = vsel %vm358, %v356, 0
    %v363 = vsel %vm358, %v357, 0
    %365 = vmatpush.bf16.msra.mxu0 0
    %366 = vmatpush.bf16.msra.mxu0 0
    %367 = vmatpush.bf16.msra.mxu0 0
    %368 = vmatpush.bf16.msra.mxu0 0
    %369 = vmatpush.bf16.msra.mxu0 %v320
    %370 = vmatpush.bf16.msra.mxu0 %v316
    %371 = vmatpush.bf16.msra.mxu0 %v312
    %372 = vmatpush.bf16.msra.mxu0 %v308
    %373 = vmatmul.bf16.gmra.mxu0 %v360
    %v374 = vpop.f32.mrf.mxu0
    %v375 = vadd.f32 %v331, %v374
    %v376 = vpop.f32.mrf.mxu0
    %v377 = vadd.f32 %v336, %v376
    %378 = vmatmul.bf16.gmra.mxu0 %v363
    %v379 = vpop.f32.mrf.mxu0
    %v380 = vadd.f32 %v341, %v379
    %v381 = vpop.f32.mrf.mxu0
    %v382 = vadd.f32 %v346, %v381
    %383 = vdwg.mxu0
    %384 = vmatpush.bf16.msra.mxu0 0
    %385 = vmatpush.bf16.msra.mxu0 0
    %386 = vmatpush.bf16.msra.mxu0 0
    %387 = vmatpush.bf16.msra.mxu0 0
    %388 = vmatpush.bf16.msra.mxu0 %v321
    %389 = vmatpush.bf16.msra.mxu0 %v317
    %390 = vmatpush.bf16.msra.mxu0 %v313
    %391 = vmatpush.bf16.msra.mxu0 %v309
    %392 = vmatmul.bf16.gmra.mxu0 %v360
    %v393 = vpop.f32.mrf.mxu0
    %v394 = vadd.f32 %v331, %v393
    %v395 = vpop.f32.mrf.mxu0
    %v396 = vadd.f32 %v336, %v395
    %397 = vmatmul.bf16.gmra.mxu0 %v363
    %v398 = vpop.f32.mrf.mxu0
    %v399 = vadd.f32 %v341, %v398
    %v400 = vpop.f32.mrf.mxu0
    %v401 = vadd.f32 %v346, %v400
    %402 = vdwg.mxu0
    %403 = vmatpush.bf16.msra.mxu0 0
    %404 = vmatpush.bf16.msra.mxu0 0
    %405 = vmatpush.bf16.msra.mxu0 0
    %406 = vmatpush.bf16.msra.mxu0 0
    %407 = vmatpush.bf16.msra.mxu0 %v322
    %408 = vmatpush.bf16.msra.mxu0 %v318
    %409 = vmatpush.bf16.msra.mxu0 %v314
    %410 = vmatpush.bf16.msra.mxu0 %v310
    %411 = vmatmul.bf16.gmra.mxu0 %v360
    %v412 = vpop.f32.mrf.mxu0
    %v413 = vadd.f32 %v331, %v412
    %v414 = vpop.f32.mrf.mxu0
    %v415 = vadd.f32 %v336, %v414
    %416 = vmatmul.bf16.gmra.mxu0 %v363
    %v417 = vpop.f32.mrf.mxu0
    %v418 = vadd.f32 %v341, %v417
    %v419 = vpop.f32.mrf.mxu0
    %v420 = vadd.f32 %v346, %v419
    %421 = vdwg.mxu0
    %422 = vmatpush.bf16.msra.mxu0 0
    %423 = vmatpush.bf16.msra.mxu0 0
    %424 = vmatpush.bf16.msra.mxu0 0
    %425 = vmatpush.bf16.msra.mxu0 0
    %426 = vmatpush.bf16.msra.mxu0 %v323
    %427 = vmatpush.bf16.msra.mxu0 %v319
    %428 = vmatpush.bf16.msra.mxu0 %v315
    %429 = vmatpush.bf16.msra.mxu0 %v311
    %430 = vmatmul.bf16.gmra.mxu0 %v360
    %v431 = vpop.f32.mrf.mxu0
    %v432 = vadd.f32 %v331, %v431
    %v433 = vpop.f32.mrf.mxu0
    %v434 = vadd.f32 %v336, %v433
    %435 = vmatmul.bf16.gmra.mxu0 %v363
    %v436 = vpop.f32.mrf.mxu0
    %v437 = vadd.f32 %v341, %v436
    %v438 = vpop.f32.mrf.mxu0
    %v439 = vadd.f32 %v346, %v438
    %440 = vdwg.mxu0
    %v441 = vmax.f32 %v375, 0.0
    %v442 = vmax.f32 %v394, 0.0
    %v443 = vmax.f32 %v413, 0.0
    %v444 = vmax.f32 %v432, 0.0
    %v445 = vmax.f32 %v377, 0.0
    %v446 = vmax.f32 %v396, 0.0
    %v447 = vmax.f32 %v415, 0.0
    %v448 = vmax.f32 %v434, 0.0
    %v449 = vmax.f32 %v380, 0.0
    %v450 = vmax.f32 %v399, 0.0
    %v451 = vmax.f32 %v418, 0.0
    %v452 = vmax.f32 %v437, 0.0
    %v453 = vmax.f32 %v382, 0.0
    %v454 = vmax.f32 %v401, 0.0
    %v455 = vmax.f32 %v420, 0.0
    %v456 = vmax.f32 %v439, 0.0
    %v457 = vld [vmem:[%s6] sm:$0x1]
    %v458 = vpack.c.bf16 %v445, %v441
    %v459 = vpack.c.bf16 %v446, %v442
    %v460 = vpack.c.bf16 %v447, %v443
    %v461 = vpack.c.bf16 %v448, %v444
    %v462 = vpack.c.bf16 %v453, %v449
    %v463 = vpack.c.bf16 %v454, %v450
    %v464 = vpack.c.bf16 %v455, %v451
    %v465 = vpack.c.bf16 %v456, %v452
    %v466 = vld [vmem:[#allocation3] sm:$0x1]
    %468 = vset.pattern.permute.xlu0 0
    %469 = vperm.xlu0 %468, %v466
    %v470 = vpop.permute.xlu0 %469
    %v472 = vperm.slane %v470, 0
    %vm473 = vcmask 261120
    %v475 = vsel %vm473, %v457, 0
    %477 = vmatpush.bf16.msra.mxu0 0
    %478 = vmatpush.bf16.msra.mxu0 0
    %479 = vmatpush.bf16.msra.mxu0 0
    %480 = vmatpush.bf16.msra.mxu0 0
    %481 = vmatpush.bf16.msra.mxu0 0
    %482 = vmatpush.bf16.msra.mxu0 0
    %483 = vmatpush.bf16.msra.mxu0 %v462
    %484 = vmatpush.bf16.msra.mxu0 %v458
    %485 = vmatmul.bf16.gmra.mxu0 %v475
    %v486 = vpop.f32.mrf.mxu0
    %v487 = vadd.f32 %v472, %v486
    %v488 = vpop.f32.mrf.mxu0
    %489 = vdwg.mxu0
    %490 = vmatpush.bf16.msra.mxu0 0
    %491 = vmatpush.bf16.msra.mxu0 0
    %492 = vmatpush.bf16.msra.mxu0 0
    %493 = vmatpush.bf16.msra.mxu0 0
    %494 = vmatpush.bf16.msra.mxu0 0
    %495 = vmatpush.bf16.msra.mxu0 0
    %496 = vmatpush.bf16.msra.mxu0 %v463
    %497 = vmatpush.bf16.msra.mxu0 %v459
    %498 = vmatmul.bf16.gmra.mxu0 %v475
    %v499 = vpop.f32.mrf.mxu0
    %v500 = vadd.f32 %v472, %v499
    %v501 = vpop.f32.mrf.mxu0
    %502 = vdwg.mxu0
    %503 = vmatpush.bf16.msra.mxu0 0
    %504 = vmatpush.bf16.msra.mxu0 0
    %505 = vmatpush.bf16.msra.mxu0 0
    %506 = vmatpush.bf16.msra.mxu0 0
    %507 = vmatpush.bf16.msra.mxu0 0
    %508 = vmatpush.bf16.msra.mxu0 0
    %509 = vmatpush.bf16.msra.mxu0 %v464
    %510 = vmatpush.bf16.msra.mxu0 %v460
    %511 = vmatmul.bf16.gmra.mxu0 %v475
    %v512 = vpop.f32.mrf.mxu0
    %v513 = vadd.f32 %v472, %v512
    %v514 = vpop.f32.mrf.mxu0
    %515 = vdwg.mxu0
    %516 = vmatpush.bf16.msra.mxu0 0
    %517 = vmatpush.bf16.msra.mxu0 0
    %518 = vmatpush.bf16.msra.mxu0 0
    %519 = vmatpush.bf16.msra.mxu0 0
    %520 = vmatpush.bf16.msra.mxu0 0
    %521 = vmatpush.bf16.msra.mxu0 0
    %522 = vmatpush.bf16.msra.mxu0 %v465
    %523 = vmatpush.bf16.msra.mxu0 %v461
    %524 = vmatmul.bf16.gmra.mxu0 %v475
    %v525 = vpop.f32.mrf.mxu0
    %v526 = vadd.f32 %v472, %v525
    %v527 = vpop.f32.mrf.mxu0
    %528 = vdwg.mxu0
    %v533 = vrot.slane %v500, 7
    %v534 = vrot.slane %v513, 6
    %v535 = vrot.slane %v526, 5
    %vm536 = vcmask 1040384
    %v537 = vsel %vm536, %v487, %v533
    %vm538 = vcmask 1042434
    %v539 = vsel %vm538, %v534, %v535
    %vm540 = vcmask 1041408
    %v541 = vsel %vm540, %v537, %v539
    %v543 = vlaneseq
    %vm544 = vcmp.ge.s32.totalorder %v543, 0
    %vm545 = vcmp.lt.s32.totalorder %v543, 512
    %vm546 = vmand %vm544, %vm545
    %547 = vst.msk [vmem:[#allocation4] sm:$0xf] %vm546, %v541
    // Predicated region
    $region34: #{tpu_custom_call.1} parent=1 // pred_check
      _
    $region35: #{tpu_custom_call.1} parent=1 // pred_check_branch
      %549 = sbr.rel (0) target = $region37
    $region36: #{tpu_custom_call.1} parent=1 // pred_region
      %551 = vsyncadd [#allocation5], 0
      %s553 = sshll.u32 [#allocation4], 4
      %s554 = int_to_ptr.vmem [resolvable:$true] %s553
      %s555 = sshll.u32 %s8, 4
      %s556 = int_to_ptr.hbm [resolvable:$true] %s555
      %558 = dma.vmem_to_hbm [thread:$0]  %s554, 64, %s556, [#allocation5]
    $region37: #{tpu_custom_call.1} parent=1 // pred_fallthru
      _
    // Predicated region
    $region38: #{tpu_custom_call.1} parent=1 // pred_check
      _
    $region39: #{tpu_custom_call.1} parent=1 // pred_check_branch
      %560 = sbr.rel (0) target = $region41
    $region40: #{tpu_custom_call.1} parent=1 // pred_region
      %562 = dma.done [#allocation5], 64
    $region41: #{tpu_custom_call.1} parent=1 // pred_fallthru
      _
    %563 = vsyncpa [#allocation5], 1

</llo_original>
